<compile_context>
chip_gen: v5e
topology: v5e:2x2
jax: 0.10.0
libtpu: 0.0.40
codegen_flags: <defaults>
</compile_context>

<pallas_src>
import math

import jax
import jax.numpy as jnp
from jax.experimental import pallas as pl
from jax.experimental.pallas import tpu as pltpu


def _spatial_dropout_kernel(x_ref, m_ref, o_ref):
    # x_ref: (TB, TS, E), m_ref: (TB, 1, E) -> broadcast multiply along seq.
    o_ref[...] = x_ref[...] * m_ref[...]


def _sublane_multiple(dtype):
    # Rows per packed vreg sublane group: 8 for 4-byte, 16 for 2-byte, 32 for 1-byte.
    return max(8, 32 // jnp.dtype(dtype).itemsize)


def _lane_fold_factor(S, E):
    """Smallest k with (k*E) % 128 == 0 and S % k == 0; 1 if none / not needed."""
    if E % 128 == 0:
        return 1
    k = 128 // math.gcd(E, 128)
    return k if (k <= S and S % k == 0) else 1


def _pick_tiles(B, S, E, dtype, target_bytes):
    """Choose (tb, ts) batch/seq tile sizes ~target_bytes per x buffer."""
    itemsize = jnp.dtype(dtype).itemsize
    row_bytes = max(1, E * itemsize)
    rows_budget = max(1, target_bytes // row_bytes)

    if S <= rows_budget:
        # One (S, E) slab is small: pack several batch rows per grid step.
        ts = S
        tb = max(1, min(B, int(rows_budget // max(1, S))))
        return tb, ts

    # Seq-tiled: largest divisor of S that is a native sublane multiple and
    # fits the budget -> unmasked stores and no ragged final tile.
    sub = _sublane_multiple(dtype)
    best = 0
    d = sub
    limit = min(S, int(rows_budget))
    while d <= limit:
        if S % d == 0:
            best = d
        d += sub
    if best:
        return 1, best
    # Fallback: sublane-aligned tile (Pallas masks the ragged last tile).
    ts = max(sub, (int(rows_budget) // sub) * sub)
    return 1, min(ts, S)


def spatial_dropout(x, drop_prob, *, key=None, training=True, target_bytes=4 << 20):
    """JAX wrapper reproducing SpatialDropout.forward for (B, S, E) inputs."""
    if not training or drop_prob == 0.0:
        return x
    if drop_prob >= 1.0:
        return jnp.zeros_like(x)
    if key is None:
        raise ValueError(
            "spatial_dropout: an explicit PRNG key is required in training mode"
        )

    B, S, E = x.shape
    keep_prob = 1.0 - float(drop_prob)

    # (B, 1, E) keep-mask, values in {0, 1/keep_prob}, precast to x.dtype.
    # TODO(synk): in-kernel Bernoulli via pltpu.prng_* is not portable to
    # interpret mode, so noise generation stays in the wrapper.
    keep = jax.random.bernoulli(key, p=keep_prob, shape=(B, 1, E))
    mask = jnp.where(keep, 1.0 / keep_prob, 0.0).astype(x.dtype)

    # Lane-dense folding of the last dim (free: minor-dim merge of a
    # row-major array); the mask is tiled so each folded position keeps its
    # own per-(B, E) noise value.
    k = _lane_fold_factor(S, E)
    S2, E2 = S // k, k * E
    x2 = x.reshape(B, S2, E2) if k > 1 else x
    mask2 = jnp.tile(mask, (1, 1, k)) if k > 1 else mask

    tb, ts = _pick_tiles(B, S2, E2, x.dtype, target_bytes)
    grid = (pl.cdiv(B, tb), pl.cdiv(S2, ts))

    # in + out double buffers = 4x tile bytes; request scoped VMEM explicitly
    # (v5e default is only 16 MiB) but stay well under v7x's 64 MiB physical.
    tile_bytes = tb * ts * E2 * jnp.dtype(x.dtype).itemsize
    vmem_limit = int(min(48 << 20, max(16 << 20, 4 * tile_bytes + (4 << 20))))

    out2 = pl.pallas_call(
        _spatial_dropout_kernel,
        out_shape=jax.ShapeDtypeStruct((B, S2, E2), x.dtype),
        grid=grid,
        in_specs=[
            pl.BlockSpec((tb, ts, E2), lambda b, s: (b, s, 0)),   # x tile
            pl.BlockSpec((tb, 1, E2), lambda b, s: (b, 0, 0)),    # per-batch mask
        ],
        out_specs=pl.BlockSpec((tb, ts, E2), lambda b, s: (b, s, 0)),
        compiler_params=pltpu.CompilerParams(
            dimension_semantics=("parallel", "parallel"),
            vmem_limit_bytes=vmem_limit,
        ),
        # TODO(synk): add input_output_aliases={0: 0} when the caller donates x
        # (removes the separate output allocation inside a training step).
    )(x2, mask2)

    return out2.reshape(B, S, E) if k > 1 else out2


if __name__ == "__main__":
    key = jax.random.PRNGKey(0)
    x_key, drop_key = jax.random.split(key)

    B, S, E = 2, 8, 32
    x = jax.random.normal(x_key, (B, S, E), dtype=jnp.float32)

    drop_prob = 0.5
    out = spatial_dropout(x, drop_prob, key=drop_key, training=True)
    out = jax.block_until_ready(out)

    # Sanity checks of the SpatialDropout semantics:
    # every output element is either 0 or x / (1 - p), and the dropped
    # embedding channels are identical across the sequence axis.
    scale = 1.0 / (1.0 - drop_prob)
    ratio_ok = jnp.logical_or(
        jnp.isclose(out, 0.0, atol=1e-6),
        jnp.isclose(out, x * scale, rtol=1e-5, atol=1e-6),
    )
    assert bool(jnp.all(ratio_ok)), "output values not in {0, x/(1-p)}"

    mask = jnp.where(jnp.abs(x) > 1e-6, out / jnp.where(x == 0, 1.0, x), 0.0)
    ref_mask = mask[:, :1, :]
    same_along_seq = jnp.logical_or(
        jnp.abs(x) <= 1e-6, jnp.isclose(mask, ref_mask, rtol=1e-4, atol=1e-4)
    )
    assert bool(jnp.all(same_along_seq)), "noise not shared across seq axis"

    # eval mode / p == 0 -> identity
    out_eval = jax.block_until_ready(
        spatial_dropout(x, drop_prob, key=drop_key, training=False)
    )
    assert bool(jnp.all(out_eval == x))

    # p == 1 -> zeros
    out_zero = jax.block_until_ready(
        spatial_dropout(x, 1.0, key=drop_key, training=True)
    )
    assert bool(jnp.all(out_zero == 0))

    # Larger, seq-tiled, E % 128 == 0 path (exercises the divisor-based tiling).
    x_big = jax.random.normal(x_key, (2, 256, 256), dtype=jnp.float32)
    out_big = jax.block_until_ready(
        spatial_dropout(x_big, 0.3, key=drop_key, training=True)
    )
    assert out_big.shape == x_big.shape

    print("KERNEL_OK")
</pallas_src>

<mosaic_0001>
module attributes {stable_mosaic.version = 11 : i64} {
  func.func @_spatial_dropout_kernel(%arg0: i32, %arg1: i32, %arg2: memref<2x2x128xf32, #tpu.memory_space<vmem>>, %arg3: memref<2x1x128xf32, #tpu.memory_space<vmem>>, %arg4: memref<2x2x128xf32, #tpu.memory_space<vmem>>) attributes {dimension_semantics = [#tpu.dimension_semantics<parallel>, #tpu.dimension_semantics<parallel>], iteration_bounds = array<i64: 1, 1>, scalar_prefetch = 0 : i64, scratch_operands = 0 : i64, tpu.core_type = #tpu.core_type<tc>, window_params = [{transform_indices = @transform_0, window_bounds = array<i64: 2, 2, 128>}, {transform_indices = @transform_1, window_bounds = array<i64: 2, 1, 128>}, {transform_indices = @transform_2, window_bounds = array<i64: 2, 2, 128>}]} {
    %c0 = arith.constant 0 : index
    %c0_0 = arith.constant 0 : index
    %c0_1 = arith.constant 0 : index
    %0 = vector.load %arg2[%c0, %c0_0, %c0_1] : memref<2x2x128xf32, #tpu.memory_space<vmem>>, vector<2x2x128xf32>
    %c0_2 = arith.constant 0 : index
    %c0_3 = arith.constant 0 : index
    %c0_4 = arith.constant 0 : index
    %1 = vector.load %arg3[%c0_2, %c0_3, %c0_4] : memref<2x1x128xf32, #tpu.memory_space<vmem>>, vector<2x1x128xf32>
    %2 = vector.broadcast %1 : vector<2x1x128xf32> to vector<2x2x128xf32>
    %3 = arith.mulf %0, %2 : vector<2x2x128xf32>
    %c0_5 = arith.constant 0 : index
    %c0_6 = arith.constant 0 : index
    %c0_7 = arith.constant 0 : index
    %4 = vector.load %arg4[%c0_5, %c0_6, %c0_7] : memref<2x2x128xf32, #tpu.memory_space<vmem>>, vector<2x2x128xf32>
    tpu.vector_store %arg4[%c0_5, %c0_6, %c0_7], %3 {strides = array<i32>} : memref<2x2x128xf32, #tpu.memory_space<vmem>>, vector<2x2x128xf32>,
    return
  }
  func.func @transform_0(%arg0: i32, %arg1: i32) -> (i32, i32, i32) {
    %c0_i32 = arith.constant 0 : i32
    %c0_i32_0 = arith.constant 0 : i32
    return %arg0, %arg1, %c0_i32 : i32, i32, i32
  }
  func.func @transform_1(%arg0: i32, %arg1: i32) -> (i32, i32, i32) {
    %c0_i32 = arith.constant 0 : i32
    %c0_i32_0 = arith.constant 0 : i32
    %c0_i32_1 = arith.constant 0 : i32
    return %arg0, %c0_i32, %c0_i32_0 : i32, i32, i32
  }
  func.func @transform_2(%arg0: i32, %arg1: i32) -> (i32, i32, i32) {
    %c0_i32 = arith.constant 0 : i32
    %c0_i32_0 = arith.constant 0 : i32
    return %arg0, %arg1, %c0_i32 : i32, i32, i32
  }
}

</mosaic_0001>

<llo_original>
// kernel: tpu_custom_call.1
$region0: #{tpu_custom_call.1}
  #allocation0 [shape = 'u32[]', space=smem, size = 0x4, offset = 0x4, fixed_abs, tag = 'smem constant byte address 0x4 - core index']
  #allocation1 [shape = 'u32[72,128]{1,0:T(1,128)}', space=vmem, size = 0x9000, scoped, tag = 'internal scratch']
  %s0 = inlined_call_operand.hbm [shape: f32[2,2,128], index: 0, kind: input, shape index: {}]
  %s1 = inlined_call_operand.hbm [shape: f32[2,1,128], index: 1, kind: input, shape index: {}]
  %s2 = inlined_call_operand.hbm [shape: f32[2,2,128], index: 2, kind: output, shape index: {}]
  %s3 = sld [smem:[#allocation0]]
  $region26: #{tpu_custom_call.1} parent=0
    _
  %s5 = ssub.s32 1, %s3
  %s6 = scalar_select 0, %s5, %s3
  $region1: #{tpu_custom_call.1} parent=0
    #allocation2 [shape = 'u8[2048]{0}', space=vmem, size = 0x800, scoped, tag = 'input window, operand 0, single buffered']
    #allocation3 [shape = 's32[1]{0}', space=sflag, size = 0x4, scoped, tag = 'scoped memory for tpu_custom_call.1']
    #allocation4 [shape = 's32[1]{0}', space=sflag, size = 0x4, scoped, tag = 'scoped memory for tpu_custom_call.1']
    #allocation5 [shape = 'u8[1024]{0}', space=vmem, size = 0x400, scoped, tag = 'input window, operand 1, single buffered']
    #allocation6 [shape = 's32[1]{0}', space=sflag, size = 0x4, scoped, tag = 'scoped memory for tpu_custom_call.1']
    #allocation7 [shape = 'u8[2048]{0}', space=vmem, size = 0x800, scoped, tag = 'output window, operand 0, single buffered']
    %7 = vsyncpa [#allocation3], 0
    %8 = vsyncpa [#allocation6], 0
    %9 = vsyncpa [#allocation4], 0
    // Predicated region
    $region2: #{tpu_custom_call.1} parent=1 // pred_check
      _
    $region3: #{tpu_custom_call.1} parent=1 // pred_check_branch
      %11 = sbr.rel (0) target = $region5
    $region4: #{tpu_custom_call.1} parent=1 // pred_region
      %13 = vsyncadd [#allocation3], 0
      %s14 = sshll.u32 %s0, 4
      %s15 = int_to_ptr.hbm [resolvable:$true] %s14
      %s16 = sshll.u32 [#allocation2], 4
      %s17 = int_to_ptr.vmem [resolvable:$true] %s16
      %22 = dma.hbm_to_vmem [thread:$0]  %s15, 64, %s17, [#allocation3], 32, 32, 2
    $region5: #{tpu_custom_call.1} parent=1 // pred_fallthru
      _
    // Predicated region
    $region6: #{tpu_custom_call.1} parent=1 // pred_check
      _
    $region7: #{tpu_custom_call.1} parent=1 // pred_check_branch
      %24 = sbr.rel (0) target = $region9
    $region8: #{tpu_custom_call.1} parent=1 // pred_region
      %26 = vsyncadd [#allocation6], 0
      %s27 = sshll.u32 %s1, 4
      %s28 = int_to_ptr.hbm [resolvable:$true] %s27
      %s29 = sshll.u32 [#allocation5], 4
      %s30 = int_to_ptr.vmem [resolvable:$true] %s29
      %35 = dma.hbm_to_vmem [thread:$0]  %s28, 32, %s30, [#allocation6], 16, 16, 1
    $region9: #{tpu_custom_call.1} parent=1 // pred_fallthru
      _
    // Predicated region
    $region10: #{tpu_custom_call.1} parent=1 // pred_check
      _
    $region11: #{tpu_custom_call.1} parent=1 // pred_check_branch
      %37 = sbr.rel (0) target = $region13
    $region12: #{tpu_custom_call.1} parent=1 // pred_region
      %39 = dma.done [#allocation3], 64
    $region13: #{tpu_custom_call.1} parent=1 // pred_fallthru
      _
    // Predicated region
    $region14: #{tpu_custom_call.1} parent=1 // pred_check
      _
    $region15: #{tpu_custom_call.1} parent=1 // pred_check_branch
      %41 = sbr.rel (0) target = $region17
    $region16: #{tpu_custom_call.1} parent=1 // pred_region
      %43 = dma.done [#allocation6], 32
    $region17: #{tpu_custom_call.1} parent=1 // pred_fallthru
      _
    %v44 = vld [vmem:[#allocation2] sm:$0x3]
    %v45 = vld [vmem:[#allocation2 + $0x2] sm:$0x3]
    %v46 = vld [vmem:[#allocation5] sm:$0x1]
    %v47 = vld [vmem:[#allocation5 + $0x1] sm:$0x1]
    %v50 = vperm.slane %v46, 0
    %v51 = vperm.slane %v47, 0
    %v54 = vmul.f32 %v44, %v50
    %v55 = vmul.f32 %v45, %v51
    %56 = vst [vmem:[#allocation7] sm:$0x3] %v54
    %57 = vst [vmem:[#allocation7 + $0x2] sm:$0x3] %v55
    // Predicated region
    $region18: #{tpu_custom_call.1} parent=1 // pred_check
      _
    $region19: #{tpu_custom_call.1} parent=1 // pred_check_branch
      %59 = sbr.rel (0) target = $region21
    $region20: #{tpu_custom_call.1} parent=1 // pred_region
      %61 = vsyncadd [#allocation4], 0
      %s62 = sshll.u32 [#allocation7], 4
      %s63 = int_to_ptr.vmem [resolvable:$true] %s62
      %s64 = sshll.u32 %s2, 4
      %s65 = int_to_ptr.hbm [resolvable:$true] %s64
      %70 = dma.vmem_to_hbm [thread:$0]  %s63, 64, %s65, [#allocation4], 32, 32, 2
    $region21: #{tpu_custom_call.1} parent=1 // pred_fallthru
      _
    // Predicated region
    $region22: #{tpu_custom_call.1} parent=1 // pred_check
      _
    $region23: #{tpu_custom_call.1} parent=1 // pred_check_branch
      %72 = sbr.rel (0) target = $region25
    $region24: #{tpu_custom_call.1} parent=1 // pred_region
      %74 = dma.done [#allocation4], 64
    $region25: #{tpu_custom_call.1} parent=1 // pred_fallthru
      _
    %75 = vsyncpa [#allocation3], 1
    %76 = vsyncpa [#allocation6], 1
    %77 = vsyncpa [#allocation4], 1

</llo_original>
